<compile_context>
chip_gen: v5e
topology: v5e:2x2
jax: 0.10.0
libtpu: 0.0.40
codegen_flags: <defaults>
</compile_context>

<pallas_src>
import functools

import jax
import jax.numpy as jnp
from jax.experimental import pallas as pl
from jax.experimental.pallas import tpu as pltpu

SUBLANE = 8
HIDDEN = 512
TM_MAX = 1024        # default max batch tile (review: 512 -> 1024)
MIN_SPLIT = 256      # split a lone tile in two for megacore when B >= this


def _round_up(x, m):
    return ((x + m - 1) // m) * m


def _choose_batch_tiling(B, tm_max=TM_MAX):
    """Pick (tm, b_pad, n_tiles): balanced, sublane-aligned batch tiles.

    - Balanced tiles (ceil(B / n_tiles) rounded up to a sublane) instead of
      padding B up to a whole extra tile (e.g. B=520 no longer pads to 1024).
    - Even tile count whenever more than one tile is needed, and a lone tile is
      split in two for mid/large B, so dimension_semantics=("parallel",) can
      spread the grid evenly over both TensorCores on v7x.
    """
    n_tiles = max(1, -(-B // tm_max))
    if n_tiles == 1:
        if B >= MIN_SPLIT:
            n_tiles = 2
    elif n_tiles % 2 == 1:
        n_tiles += 1
    tm = _round_up(-(-B // n_tiles), SUBLANE)
    return tm, tm * n_tiles, n_tiles


def _biotac_mlp_kernel(x_ref, w1_ref, b1_ref, w2_ref, b2_ref, y_ref):
    # Hidden layer: x @ W1 + b1, ReLU.  x and W1 are already bf16 (cast in the
    # wrapper), f32 accumulation on the MXU; bias add + ReLU stay f32 (VPU).
    h = jnp.dot(x_ref[...], w1_ref[...], preferred_element_type=jnp.float32)
    h = jnp.maximum(h + b1_ref[...], 0.0)

    # Output layer: h @ W2 + b2 -> (tm, 2*dim_out) f32 store.  No lane padding:
    # the masked vst on a 2*dim_out-wide block is far cheaper than writing a
    # 128-lane zero-padded f32 block back to HBM.
    y = jnp.dot(h.astype(jnp.bfloat16), w2_ref[...],
                preferred_element_type=jnp.float32)
    y_ref[...] = y + b2_ref[...]


@functools.partial(jax.jit, static_argnames=("dim_out", "tm_max"))
def biotac_encoder_forward(x, w1, b1, w2, b2, dim_out, *, tm_max=TM_MAX):
    """x: (B, dim_in) f32.  w1: (dim_in, 512) bf16, b1: (1, 512) f32,
    w2: (512, 2*dim_out) bf16, b2: (1, 2*dim_out) f32.
    Returns (mu, logvar), each (B, dim_out) f32."""
    B, dim_in = x.shape
    hidden = w1.shape[1]
    n_out = w2.shape[1]
    assert n_out == 2 * dim_out

    # Cast x in the wrapper (not in the kernel): halves the x HBM->VMEM DMA and
    # removes tm*dim_in VPU pack ops per grid step.
    x = x.astype(jnp.bfloat16)

    tm, b_pad, n_tiles = _choose_batch_tiling(B, tm_max)
    if b_pad != B:
        x = jnp.pad(x, ((0, b_pad - B), (0, 0)))

    flops = 2 * b_pad * dim_in * hidden + 2 * b_pad * hidden * n_out
    bytes_accessed = (x.size * 2 + w1.size * 2 + b1.size * 4
                      + w2.size * 2 + b2.size * 4 + b_pad * n_out * 4)
    cost = pl.CostEstimate(flops=flops, transcendentals=0,
                           bytes_accessed=bytes_accessed)

    y = pl.pallas_call(
        _biotac_mlp_kernel,
        out_shape=jax.ShapeDtypeStruct((b_pad, n_out), jnp.float32),
        grid=(n_tiles,),
        in_specs=[
            pl.BlockSpec((tm, dim_in), lambda i: (i, 0)),      # x: batch-tiled
            pl.BlockSpec((dim_in, hidden), lambda i: (0, 0)),  # W1: resident
            pl.BlockSpec((1, hidden), lambda i: (0, 0)),       # b1: resident
            pl.BlockSpec((hidden, n_out), lambda i: (0, 0)),   # W2: resident
            pl.BlockSpec((1, n_out), lambda i: (0, 0)),        # b2: resident
        ],
        out_specs=pl.BlockSpec((tm, n_out), lambda i: (i, 0)),
        compiler_params=pltpu.CompilerParams(
            dimension_semantics=("parallel",)),                # both TCs on v7x
        cost_estimate=cost,
    )(x, w1, b1, w2, b2)

    # Padded rows hold ReLU(b1)@W2+b2 (nonzero) -- slice them off before use.
    y = y[:B]
    # torch's x.chunk(2, dim=1) -> (mu, logvar), done on the un-padded columns.
    return y[:, :dim_out], y[:, dim_out:]


def init_biotac_params(key, dim_in, dim_out, hidden=HIDDEN):
    """Deterministic init mimicking nn.Linear default (uniform +/- 1/sqrt(fan_in)).
    Weights stored as (in, out) bf16; biases stay f32, shaped (1, N)."""
    k1, k2, k3, k4 = jax.random.split(key, 4)
    bound1 = 1.0 / jnp.sqrt(dim_in)
    bound2 = 1.0 / jnp.sqrt(hidden)
    n_out = 2 * dim_out

    w1 = jax.random.uniform(k1, (dim_in, hidden), jnp.float32, -bound1, bound1)
    b1 = jax.random.uniform(k2, (1, hidden), jnp.float32, -bound1, bound1)
    w2 = jax.random.uniform(k3, (hidden, n_out), jnp.float32, -bound2, bound2)
    b2 = jax.random.uniform(k4, (1, n_out), jnp.float32, -bound2, bound2)
    return w1.astype(jnp.bfloat16), b1, w2.astype(jnp.bfloat16), b2


def reference_forward(x, w1, b1, w2, b2, dim_out):
    """Plain-JAX f32 reference using the same stored parameter values."""
    w1f = w1.astype(jnp.float32)
    w2f = w2.astype(jnp.float32)
    h = jnp.maximum(x @ w1f + b1, 0.0)
    y = h @ w2f + b2
    return y[:, :dim_out], y[:, dim_out:]


if __name__ == "__main__":
    key = jax.random.PRNGKey(0)
    kx, kp = jax.random.split(key)

    batch = 10      # not a sublane multiple -> exercises pad + slice path
    dim_in = 32
    dim_out = 16

    x = jax.random.normal(kx, (batch, dim_in), jnp.float32)
    w1, b1, w2, b2 = init_biotac_params(kp, dim_in, dim_out)

    mu, logvar = biotac_encoder_forward(x, w1, b1, w2, b2, dim_out)
    mu = jax.block_until_ready(mu)
    logvar = jax.block_until_ready(logvar)

    # Correctness check against a plain-JAX f32 reference.  Tolerance accounts
    # for the intentional bf16 MXU inputs (f32 accumulation) inside the kernel.
    mu_ref, logvar_ref = reference_forward(x, w1, b1, w2, b2, dim_out)
    assert mu.shape == (batch, dim_out) and logvar.shape == (batch, dim_out)
    assert jnp.allclose(mu, mu_ref, atol=3e-2, rtol=3e-2)
    assert jnp.allclose(logvar, logvar_ref, atol=3e-2, rtol=3e-2)

    print("KERNEL_OK")
</pallas_src>

<mosaic_0001>
module attributes {stable_mosaic.version = 11 : i64} {
  func.func @_biotac_mlp_kernel(%arg0: i32, %arg1: memref<16x32xbf16, #tpu.memory_space<vmem>>, %arg2: memref<32x512xbf16, #tpu.memory_space<vmem>>, %arg3: memref<1x512xf32, #tpu.memory_space<vmem>>, %arg4: memref<512x32xbf16, #tpu.memory_space<vmem>>, %arg5: memref<1x32xf32, #tpu.memory_space<vmem>>, %arg6: memref<16x32xf32, #tpu.memory_space<vmem>>) attributes {dimension_semantics = [#tpu.dimension_semantics<parallel>], iteration_bounds = array<i64: 1>, scalar_prefetch = 0 : i64, scratch_operands = 0 : i64, tpu.core_type = #tpu.core_type<tc>, window_params = [{transform_indices = @transform_0, window_bounds = array<i64: 16, 32>}, {pipeline_mode = #tpu.pipeline_mode<synchronous>, transform_indices = @transform_1, window_bounds = array<i64: 32, 512>}, {pipeline_mode = #tpu.pipeline_mode<synchronous>, transform_indices = @transform_2, window_bounds = array<i64: 1, 512>}, {pipeline_mode = #tpu.pipeline_mode<synchronous>, transform_indices = @transform_3, window_bounds = array<i64: 512, 32>}, {pipeline_mode = #tpu.pipeline_mode<synchronous>, transform_indices = @transform_4, window_bounds = array<i64: 1, 32>}, {transform_indices = @transform_5, window_bounds = array<i64: 16, 32>}]} {
    %c0 = arith.constant 0 : index
    %c0_0 = arith.constant 0 : index
    %0 = vector.load %arg1[%c0, %c0_0] : memref<16x32xbf16, #tpu.memory_space<vmem>>, vector<16x32xbf16>
    %c0_1 = arith.constant 0 : index
    %c0_2 = arith.constant 0 : index
    %1 = vector.load %arg2[%c0_1, %c0_2] : memref<32x512xbf16, #tpu.memory_space<vmem>>, vector<32x512xbf16>
    %cst = arith.constant dense<0.000000e+00> : vector<16x512xf32>
    %2 = tpu.matmul %0, %1, %cst {dimension_numbers = #tpu.dot_dimension_numbers<[1], [0], [0], [1], [0, 0, 1, 1], [], []>} : vector<16x32xbf16>, vector<32x512xbf16>, vector<16x512xf32> -> vector<16x512xf32>
    %c0_3 = arith.constant 0 : index
    %c0_4 = arith.constant 0 : index
    %3 = vector.load %arg3[%c0_3, %c0_4] : memref<1x512xf32, #tpu.memory_space<vmem>>, vector<1x512xf32>
    %4 = vector.broadcast %3 : vector<1x512xf32> to vector<16x512xf32>
    %5 = arith.addf %2, %4 : vector<16x512xf32>
    %cst_5 = arith.constant 0.000000e+00 : f32
    %6 = vector.broadcast %cst_5 : f32 to vector<16x512xf32>
    %7 = arith.maximumf %5, %6 : vector<16x512xf32>
    %8 = arith.truncf %7 : vector<16x512xf32> to vector<16x512xbf16>
    %c0_6 = arith.constant 0 : index
    %c0_7 = arith.constant 0 : index
    %9 = vector.load %arg4[%c0_6, %c0_7] : memref<512x32xbf16, #tpu.memory_space<vmem>>, vector<512x32xbf16>
    %cst_8 = arith.constant dense<0.000000e+00> : vector<16x32xf32>
    %10 = tpu.matmul %8, %9, %cst_8 {dimension_numbers = #tpu.dot_dimension_numbers<[1], [0], [0], [1], [0, 0, 1, 1], [], []>} : vector<16x512xbf16>, vector<512x32xbf16>, vector<16x32xf32> -> vector<16x32xf32>
    %c0_9 = arith.constant 0 : index
    %c0_10 = arith.constant 0 : index
    %11 = vector.load %arg5[%c0_9, %c0_10] : memref<1x32xf32, #tpu.memory_space<vmem>>, vector<1x32xf32>
    %12 = vector.broadcast %11 : vector<1x32xf32> to vector<16x32xf32>
    %13 = arith.addf %10, %12 : vector<16x32xf32>
    %c0_11 = arith.constant 0 : index
    %c0_12 = arith.constant 0 : index
    %14 = vector.load %arg6[%c0_11, %c0_12] : memref<16x32xf32, #tpu.memory_space<vmem>>, vector<16x32xf32>
    tpu.vector_store %arg6[%c0_11, %c0_12], %13 {strides = array<i32>} : memref<16x32xf32, #tpu.memory_space<vmem>>, vector<16x32xf32>,
    return
  }
  func.func @transform_0(%arg0: i32) -> (i32, i32) {
    %c0_i32 = arith.constant 0 : i32
    %c0_i32_0 = arith.constant 0 : i32
    return %arg0, %c0_i32 : i32, i32
  }
  func.func @transform_1(%arg0: i32) -> (i32, i32) {
    %c0_i32 = arith.constant 0 : i32
    %c0_i32_0 = arith.constant 0 : i32
    %c0_i32_1 = arith.constant 0 : i32
    return %c0_i32, %c0_i32_0 : i32, i32
  }
  func.func @transform_2(%arg0: i32) -> (i32, i32) {
    %c0_i32 = arith.constant 0 : i32
    %c0_i32_0 = arith.constant 0 : i32
    %c0_i32_1 = arith.constant 0 : i32
    return %c0_i32, %c0_i32_0 : i32, i32
  }
  func.func @transform_3(%arg0: i32) -> (i32, i32) {
    %c0_i32 = arith.constant 0 : i32
    %c0_i32_0 = arith.constant 0 : i32
    %c0_i32_1 = arith.constant 0 : i32
    return %c0_i32, %c0_i32_0 : i32, i32
  }
  func.func @transform_4(%arg0: i32) -> (i32, i32) {
    %c0_i32 = arith.constant 0 : i32
    %c0_i32_0 = arith.constant 0 : i32
    %c0_i32_1 = arith.constant 0 : i32
    return %c0_i32, %c0_i32_0 : i32, i32
  }
  func.func @transform_5(%arg0: i32) -> (i32, i32) {
    %c0_i32 = arith.constant 0 : i32
    %c0_i32_0 = arith.constant 0 : i32
    return %arg0, %c0_i32 : i32, i32
  }
}

</mosaic_0001>

<llo_original>
// kernel: biotac_encoder_forward.1
$region0: #{biotac_encoder_forward.1}
  #allocation0 [shape = 'u32[]', space=smem, size = 0x4, offset = 0x4, fixed_abs, tag = 'smem constant byte address 0x4 - core index']
  #allocation1 [shape = 'u32[72,128]{1,0:T(1,128)}', space=vmem, size = 0x9000, scoped, tag = 'internal scratch']
  %s0 = inlined_call_operand.vmem [shape: bf16[16,32], index: 0, kind: input, shape index: {}]
  %s1 = inlined_call_operand.vmem [shape: bf16[32,512], index: 1, kind: input, shape index: {}]
  %s2 = inlined_call_operand.vmem [shape: f32[1,512], index: 2, kind: input, shape index: {}]
  %s3 = inlined_call_operand.vmem [shape: bf16[512,32], index: 3, kind: input, shape index: {}]
  %s4 = inlined_call_operand.vmem [shape: f32[1,32], index: 4, kind: input, shape index: {}]
  %s5 = inlined_call_operand.vmem [shape: f32[16,32], index: 5, kind: output, shape index: {}]
  %s6 = sld [smem:[#allocation0]]
  $region30: #{biotac_encoder_forward.1} parent=0
    _
  %s8 = ssub.s32 1, %s6
  %s9 = scalar_select 0, %s8, %s6
  // Predicated region
  $region2: #{biotac_encoder_forward.1} parent=0 // pred_check
    _
  $region3: #{biotac_encoder_forward.1} parent=0 // pred_check_branch
    %11 = sbr.rel (0) target = $region5
  $region4: #{biotac_encoder_forward.1} parent=0 // pred_region
    _
  $region5: #{biotac_encoder_forward.1} parent=0 // pred_fallthru
    _
  // Predicated region
  $region6: #{biotac_encoder_forward.1} parent=0 // pred_check
    _
  $region7: #{biotac_encoder_forward.1} parent=0 // pred_check_branch
    %13 = sbr.rel (0) target = $region9
  $region8: #{biotac_encoder_forward.1} parent=0 // pred_region
    _
  $region9: #{biotac_encoder_forward.1} parent=0 // pred_fallthru
    _
  // Predicated region
  $region10: #{biotac_encoder_forward.1} parent=0 // pred_check
    _
  $region11: #{biotac_encoder_forward.1} parent=0 // pred_check_branch
    %15 = sbr.rel (0) target = $region13
  $region12: #{biotac_encoder_forward.1} parent=0 // pred_region
    _
  $region13: #{biotac_encoder_forward.1} parent=0 // pred_fallthru
    _
  // Predicated region
  $region14: #{biotac_encoder_forward.1} parent=0 // pred_check
    _
  $region15: #{biotac_encoder_forward.1} parent=0 // pred_check_branch
    %17 = sbr.rel (0) target = $region17
  $region16: #{biotac_encoder_forward.1} parent=0 // pred_region
    _
  $region17: #{biotac_encoder_forward.1} parent=0 // pred_fallthru
    _
  // Predicated region
  $region18: #{biotac_encoder_forward.1} parent=0 // pred_check
    _
  $region19: #{biotac_encoder_forward.1} parent=0 // pred_check_branch
    %19 = sbr.rel (0) target = $region21
  $region20: #{biotac_encoder_forward.1} parent=0 // pred_region
    _
  $region21: #{biotac_encoder_forward.1} parent=0 // pred_fallthru
    _
  %v21 = vld [vmem:[%s0] sm:$0xf]
  %v22 = vld [vmem:[%s0 + $0x4] sm:$0xf]
  %v23 = vld [vmem:[%s1] sm:$0xff]
  %v24 = vld [vmem:[%s1 + $0x8] sm:$0xff]
  %v25 = vld [vmem:[%s1 + $0x10] sm:$0xff]
  %v26 = vld [vmem:[%s1 + $0x18] sm:$0xff]
  %v27 = vld [vmem:[%s1 + $0x20] sm:$0xff]
  %v28 = vld [vmem:[%s1 + $0x28] sm:$0xff]
  %v29 = vld [vmem:[%s1 + $0x30] sm:$0xff]
  %v30 = vld [vmem:[%s1 + $0x38] sm:$0xff]
  %v31 = vld [vmem:[%s2] sm:$0xf]
  %v33 = vperm.slane %v31, 0
  %v34 = vperm.slane %v31, 1
  %v35 = vperm.slane %v31, 2
  %v36 = vperm.slane %v31, 3
  %v43 = vunpack.c.l.b16 %v21
  %v44 = vunpack.c.l.b16 %v22
  %v45 = vpack.c.b16 %v44, %v43
  %v54 = vunpack.c.l.b16 %v23
  %v55 = vunpack.c.h.b16 %v23
  %v56 = vunpack.c.l.b16 %v24
  %v57 = vunpack.c.h.b16 %v24
  %v58 = vunpack.c.l.b16 %v25
  %v59 = vunpack.c.h.b16 %v25
  %v60 = vunpack.c.l.b16 %v26
  %v61 = vunpack.c.h.b16 %v26
  %v62 = vunpack.c.l.b16 %v27
  %v63 = vunpack.c.h.b16 %v27
  %v64 = vunpack.c.l.b16 %v28
  %v65 = vunpack.c.h.b16 %v28
  %v66 = vunpack.c.l.b16 %v29
  %v67 = vunpack.c.h.b16 %v29
  %v68 = vunpack.c.l.b16 %v30
  %v69 = vunpack.c.h.b16 %v30
  %v70 = vpack.c.b16 %v58, %v54
  %v71 = vpack.c.b16 %v59, %v55
  %v72 = vpack.c.b16 %v60, %v56
  %v73 = vpack.c.b16 %v61, %v57
  %v74 = vpack.c.b16 %v66, %v62
  %v75 = vpack.c.b16 %v67, %v63
  %v76 = vpack.c.b16 %v68, %v64
  %v77 = vpack.c.b16 %v69, %v65
  %vm86 = vcmask 261120
  %v88 = vsel %vm86, %v45, 0
  %90 = vmatpush.bf16.msra.mxu0 0
  %91 = vmatpush.bf16.msra.mxu0 0
  %92 = vmatpush.bf16.msra.mxu0 0
  %93 = vmatpush.bf16.msra.mxu0 0
  %94 = vmatpush.bf16.msra.mxu0 0
  %95 = vmatpush.bf16.msra.mxu0 0
  %96 = vmatpush.bf16.msra.mxu0 %v74
  %97 = vmatpush.bf16.msra.mxu0 %v70
  %98 = vmatmul.bf16.gmra.mxu0 %v88
  %v99 = vpop.f32.mrf.mxu0
  %v100 = vadd.f32 %v33, %v99
  %v101 = vpop.f32.mrf.mxu0
  %v102 = vadd.f32 %v33, %v101
  %103 = vdwg.mxu0
  %104 = vmatpush.bf16.msra.mxu0 0
  %105 = vmatpush.bf16.msra.mxu0 0
  %106 = vmatpush.bf16.msra.mxu0 0
  %107 = vmatpush.bf16.msra.mxu0 0
  %108 = vmatpush.bf16.msra.mxu0 0
  %109 = vmatpush.bf16.msra.mxu0 0
  %110 = vmatpush.bf16.msra.mxu0 %v75
  %111 = vmatpush.bf16.msra.mxu0 %v71
  %112 = vmatmul.bf16.gmra.mxu0 %v88
  %v113 = vpop.f32.mrf.mxu0
  %v114 = vadd.f32 %v34, %v113
  %v115 = vpop.f32.mrf.mxu0
  %v116 = vadd.f32 %v34, %v115
  %117 = vdwg.mxu0
  %118 = vmatpush.bf16.msra.mxu0 0
  %119 = vmatpush.bf16.msra.mxu0 0
  %120 = vmatpush.bf16.msra.mxu0 0
  %121 = vmatpush.bf16.msra.mxu0 0
  %122 = vmatpush.bf16.msra.mxu0 0
  %123 = vmatpush.bf16.msra.mxu0 0
  %124 = vmatpush.bf16.msra.mxu0 %v76
  %125 = vmatpush.bf16.msra.mxu0 %v72
  %126 = vmatmul.bf16.gmra.mxu0 %v88
  %v127 = vpop.f32.mrf.mxu0
  %v128 = vadd.f32 %v35, %v127
  %v129 = vpop.f32.mrf.mxu0
  %v130 = vadd.f32 %v35, %v129
  %131 = vdwg.mxu0
  %132 = vmatpush.bf16.msra.mxu0 0
  %133 = vmatpush.bf16.msra.mxu0 0
  %134 = vmatpush.bf16.msra.mxu0 0
  %135 = vmatpush.bf16.msra.mxu0 0
  %136 = vmatpush.bf16.msra.mxu0 0
  %137 = vmatpush.bf16.msra.mxu0 0
  %138 = vmatpush.bf16.msra.mxu0 %v77
  %139 = vmatpush.bf16.msra.mxu0 %v73
  %140 = vmatmul.bf16.gmra.mxu0 %v88
  %v141 = vpop.f32.mrf.mxu0
  %v142 = vadd.f32 %v36, %v141
  %v143 = vpop.f32.mrf.mxu0
  %v144 = vadd.f32 %v36, %v143
  %145 = vdwg.mxu0
  %v146 = vmax.f32 %v100, 0.0
  %v147 = vmax.f32 %v114, 0.0
  %v148 = vmax.f32 %v128, 0.0
  %v149 = vmax.f32 %v142, 0.0
  %v150 = vmax.f32 %v102, 0.0
  %v151 = vmax.f32 %v116, 0.0
  %v152 = vmax.f32 %v130, 0.0
  %v153 = vmax.f32 %v144, 0.0
  %v154 = vpack.c.bf16 %v150, %v146
  %v155 = vpack.c.bf16 %v151, %v147
  %v156 = vpack.c.bf16 %v152, %v148
  %v157 = vpack.c.bf16 %v153, %v149
  %v158 = vld [vmem:[%s3] sm:$0xf]
  %v159 = vld [vmem:[%s3 + $0x4] sm:$0xf]
  %v160 = vld [vmem:[%s3 + $0x8] sm:$0xf]
  %v161 = vld [vmem:[%s3 + $0xc] sm:$0xf]
  %v162 = vld [vmem:[%s3 + $0x10] sm:$0xf]
  %v163 = vld [vmem:[%s3 + $0x14] sm:$0xf]
  %v164 = vld [vmem:[%s3 + $0x18] sm:$0xf]
  %v165 = vld [vmem:[%s3 + $0x1c] sm:$0xf]
  %v166 = vld [vmem:[%s3 + $0x20] sm:$0xf]
  %v167 = vld [vmem:[%s3 + $0x24] sm:$0xf]
  %v168 = vld [vmem:[%s3 + $0x28] sm:$0xf]
  %v169 = vld [vmem:[%s3 + $0x2c] sm:$0xf]
  %v170 = vld [vmem:[%s3 + $0x30] sm:$0xf]
  %v171 = vld [vmem:[%s3 + $0x34] sm:$0xf]
  %v172 = vld [vmem:[%s3 + $0x38] sm:$0xf]
  %v173 = vld [vmem:[%s3 + $0x3c] sm:$0xf]
  %v174 = vld [vmem:[%s3 + $0x40] sm:$0xf]
  %v175 = vld [vmem:[%s3 + $0x44] sm:$0xf]
  %v176 = vld [vmem:[%s3 + $0x48] sm:$0xf]
  %v177 = vld [vmem:[%s3 + $0x4c] sm:$0xf]
  %v178 = vld [vmem:[%s3 + $0x50] sm:$0xf]
  %v179 = vld [vmem:[%s3 + $0x54] sm:$0xf]
  %v180 = vld [vmem:[%s3 + $0x58] sm:$0xf]
  %v181 = vld [vmem:[%s3 + $0x5c] sm:$0xf]
  %v182 = vld [vmem:[%s3 + $0x60] sm:$0xf]
  %v183 = vld [vmem:[%s3 + $0x64] sm:$0xf]
  %v184 = vld [vmem:[%s3 + $0x68] sm:$0xf]
  %v185 = vld [vmem:[%s3 + $0x6c] sm:$0xf]
  %v186 = vld [vmem:[%s3 + $0x70] sm:$0xf]
  %v187 = vld [vmem:[%s3 + $0x74] sm:$0xf]
  %v188 = vld [vmem:[%s3 + $0x78] sm:$0xf]
  %v189 = vld [vmem:[%s3 + $0x7c] sm:$0xf]
  %v190 = vld [vmem:[%s3 + $0x80] sm:$0xf]
  %v191 = vld [vmem:[%s3 + $0x84] sm:$0xf]
  %v192 = vld [vmem:[%s3 + $0x88] sm:$0xf]
  %v193 = vld [vmem:[%s3 + $0x8c] sm:$0xf]
  %v194 = vld [vmem:[%s3 + $0x90] sm:$0xf]
  %v195 = vld [vmem:[%s3 + $0x94] sm:$0xf]
  %v196 = vld [vmem:[%s3 + $0x98] sm:$0xf]
  %v197 = vld [vmem:[%s3 + $0x9c] sm:$0xf]
  %v198 = vld [vmem:[%s3 + $0xa0] sm:$0xf]
  %v199 = vld [vmem:[%s3 + $0xa4] sm:$0xf]
  %v200 = vld [vmem:[%s3 + $0xa8] sm:$0xf]
  %v201 = vld [vmem:[%s3 + $0xac] sm:$0xf]
  %v202 = vld [vmem:[%s3 + $0xb0] sm:$0xf]
  %v203 = vld [vmem:[%s3 + $0xb4] sm:$0xf]
  %v204 = vld [vmem:[%s3 + $0xb8] sm:$0xf]
  %v205 = vld [vmem:[%s3 + $0xbc] sm:$0xf]
  %v206 = vld [vmem:[%s3 + $0xc0] sm:$0xf]
  %v207 = vld [vmem:[%s3 + $0xc4] sm:$0xf]
  %v208 = vld [vmem:[%s3 + $0xc8] sm:$0xf]
  %v209 = vld [vmem:[%s3 + $0xcc] sm:$0xf]
  %v210 = vld [vmem:[%s3 + $0xd0] sm:$0xf]
  %v211 = vld [vmem:[%s3 + $0xd4] sm:$0xf]
  %v212 = vld [vmem:[%s3 + $0xd8] sm:$0xf]
  %v213 = vld [vmem:[%s3 + $0xdc] sm:$0xf]
  %v214 = vld [vmem:[%s3 + $0xe0] sm:$0xf]
  %v215 = vld [vmem:[%s3 + $0xe4] sm:$0xf]
  %v216 = vld [vmem:[%s3 + $0xe8] sm:$0xf]
  %v217 = vld [vmem:[%s3 + $0xec] sm:$0xf]
  %v218 = vld [vmem:[%s3 + $0xf0] sm:$0xf]
  %v219 = vld [vmem:[%s3 + $0xf4] sm:$0xf]
  %v220 = vld [vmem:[%s3 + $0xf8] sm:$0xf]
  %v221 = vld [vmem:[%s3 + $0xfc] sm:$0xf]
  %v222 = vld [vmem:[%s4] sm:$0x1]
  %v224 = vperm.slane %v222, 0
  %v290 = vunpack.c.l.b16 %v158
  %v291 = vunpack.c.l.b16 %v159
  %v292 = vunpack.c.l.b16 %v160
  %v293 = vunpack.c.l.b16 %v161
  %v294 = vunpack.c.l.b16 %v162
  %v295 = vunpack.c.l.b16 %v163
  %v296 = vunpack.c.l.b16 %v164
  %v297 = vunpack.c.l.b16 %v165
  %v298 = vunpack.c.l.b16 %v166
  %v299 = vunpack.c.l.b16 %v167
  %v300 = vunpack.c.l.b16 %v168
  %v301 = vunpack.c.l.b16 %v169
  %v302 = vunpack.c.l.b16 %v170
  %v303 = vunpack.c.l.b16 %v171
  %v304 = vunpack.c.l.b16 %v172
  %v305 = vunpack.c.l.b16 %v173
  %v306 = vunpack.c.l.b16 %v174
  %v307 = vunpack.c.l.b16 %v175
  %v308 = vunpack.c.l.b16 %v176
  %v309 = vunpack.c.l.b16 %v177
  %v310 = vunpack.c.l.b16 %v178
  %v311 = vunpack.c.l.b16 %v179
  %v312 = vunpack.c.l.b16 %v180
  %v313 = vunpack.c.l.b16 %v181
  %v314 = vunpack.c.l.b16 %v182
  %v315 = vunpack.c.l.b16 %v183
  %v316 = vunpack.c.l.b16 %v184
  %v317 = vunpack.c.l.b16 %v185
  %v318 = vunpack.c.l.b16 %v186
  %v319 = vunpack.c.l.b16 %v187
  %v320 = vunpack.c.l.b16 %v188
  %v321 = vunpack.c.l.b16 %v189
  %v322 = vunpack.c.l.b16 %v190
  %v323 = vunpack.c.l.b16 %v191
  %v324 = vunpack.c.l.b16 %v192
  %v325 = vunpack.c.l.b16 %v193
  %v326 = vunpack.c.l.b16 %v194
  %v327 = vunpack.c.l.b16 %v195
  %v328 = vunpack.c.l.b16 %v196
  %v329 = vunpack.c.l.b16 %v197
  %v330 = vunpack.c.l.b16 %v198
  %v331 = vunpack.c.l.b16 %v199
  %v332 = vunpack.c.l.b16 %v200
  %v333 = vunpack.c.l.b16 %v201
  %v334 = vunpack.c.l.b16 %v202
  %v335 = vunpack.c.l.b16 %v203
  %v336 = vunpack.c.l.b16 %v204
  %v337 = vunpack.c.l.b16 %v205
  %v338 = vunpack.c.l.b16 %v206
  %v339 = vunpack.c.l.b16 %v207
  %v340 = vunpack.c.l.b16 %v208
  %v341 = vunpack.c.l.b16 %v209
  %v342 = vunpack.c.l.b16 %v210
  %v343 = vunpack.c.l.b16 %v211
  %v344 = vunpack.c.l.b16 %v212
  %v345 = vunpack.c.l.b16 %v213
  %v346 = vunpack.c.l.b16 %v214
  %v347 = vunpack.c.l.b16 %v215
  %v348 = vunpack.c.l.b16 %v216
  %v349 = vunpack.c.l.b16 %v217
  %v350 = vunpack.c.l.b16 %v218
  %v351 = vunpack.c.l.b16 %v219
  %v352 = vunpack.c.l.b16 %v220
  %v353 = vunpack.c.l.b16 %v221
  %v354 = vpack.c.b16 %v291, %v290
  %v355 = vpack.c.b16 %v293, %v292
  %v356 = vpack.c.b16 %v295, %v294
  %v357 = vpack.c.b16 %v297, %v296
  %v358 = vpack.c.b16 %v299, %v298
  %v359 = vpack.c.b16 %v301, %v300
  %v360 = vpack.c.b16 %v303, %v302
  %v361 = vpack.c.b16 %v305, %v304
  %v362 = vpack.c.b16 %v307, %v306
  %v363 = vpack.c.b16 %v309, %v308
  %v364 = vpack.c.b16 %v311, %v310
  %v365 = vpack.c.b16 %v313, %v312
  %v366 = vpack.c.b16 %v315, %v314
  %v367 = vpack.c.b16 %v317, %v316
  %v368 = vpack.c.b16 %v319, %v318
  %v369 = vpack.c.b16 %v321, %v320
  %v370 = vpack.c.b16 %v323, %v322
  %v371 = vpack.c.b16 %v325, %v324
  %v372 = vpack.c.b16 %v327, %v326
  %v373 = vpack.c.b16 %v329, %v328
  %v374 = vpack.c.b16 %v331, %v330
  %v375 = vpack.c.b16 %v333, %v332
  %v376 = vpack.c.b16 %v335, %v334
  %v377 = vpack.c.b16 %v337, %v336
  %v378 = vpack.c.b16 %v339, %v338
  %v379 = vpack.c.b16 %v341, %v340
  %v380 = vpack.c.b16 %v343, %v342
  %v381 = vpack.c.b16 %v345, %v344
  %v382 = vpack.c.b16 %v347, %v346
  %v383 = vpack.c.b16 %v349, %v348
  %v384 = vpack.c.b16 %v351, %v350
  %v385 = vpack.c.b16 %v353, %v352
  %418 = vmatpush.bf16.msra.mxu0 %v361
  %419 = vmatpush.bf16.msra.mxu0 %v360
  %420 = vmatpush.bf16.msra.mxu0 %v359
  %421 = vmatpush.bf16.msra.mxu0 %v358
  %422 = vmatpush.bf16.msra.mxu0 %v357
  %423 = vmatpush.bf16.msra.mxu0 %v356
  %424 = vmatpush.bf16.msra.mxu0 %v355
  %425 = vmatpush.bf16.msra.mxu0 %v354
  %426 = vmatmul.bf16.gmra.mxu0 %v154
  %v427 = vpop.f32.mrf.mxu0
  %v428 = vadd.f32 %v224, %v427
  %v429 = vpop.f32.mrf.mxu0
  %v430 = vadd.f32 %v224, %v429
  %431 = vdwg.mxu0
  %432 = vmatpush.bf16.msra.mxu0 %v369
  %433 = vmatpush.bf16.msra.mxu0 %v368
  %434 = vmatpush.bf16.msra.mxu0 %v367
  %435 = vmatpush.bf16.msra.mxu0 %v366
  %436 = vmatpush.bf16.msra.mxu0 %v365
  %437 = vmatpush.bf16.msra.mxu0 %v364
  %438 = vmatpush.bf16.msra.mxu0 %v363
  %439 = vmatpush.bf16.msra.mxu0 %v362
  %440 = vmatmul.bf16.gmra.mxu0 %v155
  %v441 = vpop.f32.mrf.mxu0
  %v442 = vadd.f32 %v428, %v441
  %v443 = vpop.f32.mrf.mxu0
  %v444 = vadd.f32 %v430, %v443
  %445 = vdwg.mxu0
  %446 = vmatpush.bf16.msra.mxu0 %v377
  %447 = vmatpush.bf16.msra.mxu0 %v376
  %448 = vmatpush.bf16.msra.mxu0 %v375
  %449 = vmatpush.bf16.msra.mxu0 %v374
  %450 = vmatpush.bf16.msra.mxu0 %v373
  %451 = vmatpush.bf16.msra.mxu0 %v372
  %452 = vmatpush.bf16.msra.mxu0 %v371
  %453 = vmatpush.bf16.msra.mxu0 %v370
  %454 = vmatmul.bf16.gmra.mxu0 %v156
  %v455 = vpop.f32.mrf.mxu0
  %v456 = vadd.f32 %v442, %v455
  %v457 = vpop.f32.mrf.mxu0
  %v458 = vadd.f32 %v444, %v457
  %459 = vdwg.mxu0
  %460 = vmatpush.bf16.msra.mxu0 %v385
  %461 = vmatpush.bf16.msra.mxu0 %v384
  %462 = vmatpush.bf16.msra.mxu0 %v383
  %463 = vmatpush.bf16.msra.mxu0 %v382
  %464 = vmatpush.bf16.msra.mxu0 %v381
  %465 = vmatpush.bf16.msra.mxu0 %v380
  %466 = vmatpush.bf16.msra.mxu0 %v379
  %467 = vmatpush.bf16.msra.mxu0 %v378
  %468 = vmatmul.bf16.gmra.mxu0 %v157
  %v469 = vpop.f32.mrf.mxu0
  %v470 = vadd.f32 %v456, %v469
  %v471 = vpop.f32.mrf.mxu0
  %v472 = vadd.f32 %v458, %v471
  %473 = vdwg.mxu0
  %474 = vst.msk [vmem:[%s5] sm:$0xff] %vm86, %v470
  %475 = vst.msk [vmem:[%s5 + $0x8] sm:$0xff] %vm86, %v472
  // Predicated region
  $region22: #{biotac_encoder_forward.1} parent=0 // pred_check
    _
  $region23: #{biotac_encoder_forward.1} parent=0 // pred_check_branch
    %477 = sbr.rel (0) target = $region25
  $region24: #{biotac_encoder_forward.1} parent=0 // pred_region
    _
  $region25: #{biotac_encoder_forward.1} parent=0 // pred_fallthru
    _
  // Predicated region
  $region26: #{biotac_encoder_forward.1} parent=0 // pred_check
    _
  $region27: #{biotac_encoder_forward.1} parent=0 // pred_check_branch
    %479 = sbr.rel (0) target = $region29
  $region28: #{biotac_encoder_forward.1} parent=0 // pred_region
    _
  $region29: #{biotac_encoder_forward.1} parent=0 // pred_fallthru
    _

</llo_original>
